<compile_context>
chip_gen: v6e
topology: v6e:2x2x1
jax: 0.10.0
libtpu: 0.0.40
codegen_flags: <defaults>
</compile_context>

<pallas_src>
import jax
import jax.numpy as jnp
from jax.experimental import pallas as pl
from jax.experimental.pallas import tpu as pltpu


def _make_conv_kernel(N, Ho, Wo, Cout, KH, stride, relu):
    """Builds the conv(+ReLU) kernel body; all shapes/flags are static."""
    M = N * Ho

    def kernel(x_ref, t_ref, o_ref):
        # x_ref : [N, Hp, Wp*Cin]       zero-padded rows, (W, Cin) on lanes (bf16)
        # t_ref : [KH, Wp*Cin, Wo*Cout] per-kh block-Toeplitz weights (bf16)
        # o_ref : [N*Ho, Wo*Cout]       lane-dense output
        acc = jnp.zeros((M, Wo * Cout), jnp.float32)
        for kh in range(KH):  # static unroll over the KH tap rows
            if stride == 1:
                rows = x_ref[:, kh:kh + Ho, :]                 # [N, Ho, Wp*Cin]
            else:
                rows = x_ref[:, pl.ds(kh, Ho, stride), :]      # strided H windows
            lhs = rows.reshape(M, rows.shape[-1])              # [N*Ho, Wp*Cin]
            acc = acc + jnp.dot(lhs, t_ref[kh],
                                preferred_element_type=jnp.float32)
        out = jnp.maximum(acc, 0.0) if relu else acc           # ReLU path of BasicConv
        o_ref[...] = out.astype(o_ref.dtype)

    return kernel


def basic_conv(x_nchw, weight_oihw, *, stride=1, relu=True,
               compute_dtype=jnp.bfloat16):
    """Forward of BasicConv(in, out, kernel_size, stride, bias=False, relu=relu).

    x_nchw      : [N, Cin, H, W]       (PyTorch NCHW)
    weight_oihw : [Cout, Cin, KH, KW]  (PyTorch Conv2d weight layout)
    returns     : [N, Cout, Ho, Wo]    (NCHW, matching the PyTorch module)
    """
    N, Cin, H, W = x_nchw.shape
    Cout, Cin_w, KH, KW = weight_oihw.shape
    assert Cin_w == Cin, "groups != 1 is not supported"
    # TODO(synk): norm=True (BatchNorm2d), bias=True, transpose=True
    # (ConvTranspose2d), groups != 1 and channel_shuffle variants of BasicConv
    # are not implemented; only the default Conv2d(+ReLU) path is covered.

    pad_h, pad_w = KH // 2, KW // 2       # PyTorch: padding = kernel_size // 2
    Hp, Wp = H + 2 * pad_h, W + 2 * pad_w
    Ho = (Hp - KH) // stride + 1
    Wo = (Wp - KW) // stride + 1

    # ---- activation glue: NCHW -> padded rows with (W, Cin) flattened to lanes
    x_nhwc = jnp.transpose(x_nchw, (0, 2, 3, 1))                       # [N,H,W,Cin]
    x_pad = jnp.pad(x_nhwc, ((0, 0), (pad_h, pad_h), (pad_w, pad_w), (0, 0)))
    x_rows = x_pad.reshape(N, Hp, Wp * Cin).astype(compute_dtype)      # [N,Hp,Wp*Cin]

    # ---- weight preprocessing: per-kh block-Toeplitz matrices ----------------
    # T[kh][w*Cin + ci, wo*Cout + co] = W[co, ci, kh, w - wo*stride]  (0 otherwise)
    w_hwio = jnp.transpose(weight_oihw, (2, 3, 1, 0))                  # [KH,KW,Cin,Cout]
    wi = jnp.arange(Wp)
    wo = jnp.arange(Wo)
    kw_idx = wi[:, None] - wo[None, :] * stride                        # [Wp, Wo]
    valid = (kw_idx >= 0) & (kw_idx < KW)
    kw_safe = jnp.clip(kw_idx, 0, KW - 1)
    t = w_hwio[:, kw_safe]                                             # [KH,Wp,Wo,Cin,Cout]
    t = jnp.where(valid[None, :, :, None, None], t, 0.0)
    t = jnp.transpose(t, (0, 1, 3, 2, 4)).reshape(KH, Wp * Cin, Wo * Cout)
    t = t.astype(compute_dtype)                                        # [KH,Wp*Cin,Wo*Cout]

    kernel = _make_conv_kernel(N, Ho, Wo, Cout, KH, stride, relu)

    out_flat = pl.pallas_call(
        kernel,
        out_shape=jax.ShapeDtypeStruct((N * Ho, Wo * Cout), x_nchw.dtype),
        grid_spec=pltpu.PrefetchScalarGridSpec(
            num_scalar_prefetch=0,
            grid=(1,),  # single step: batch folded into the matmul M dim
            in_specs=[
                pl.BlockSpec((N, Hp, Wp * Cin), lambda i: (0, 0, 0)),
                pl.BlockSpec((KH, Wp * Cin, Wo * Cout), lambda i: (0, 0, 0)),
            ],
            out_specs=pl.BlockSpec((N * Ho, Wo * Cout), lambda i: (0, 0)),
        ),
        compiler_params=pltpu.CompilerParams(
            dimension_semantics=("arbitrary",)),
    )(x_rows, t)

    out = out_flat.reshape(N, Ho, Wo, Cout)           # lane-dense slab -> NHWC
    return jnp.transpose(out, (0, 3, 1, 2))           # back to NCHW


if __name__ == "__main__":
    # BasicConv(in_channel=4, out_channel=8, kernel_size=3, stride=1)
    N, Cin, H, W = 2, 4, 16, 16
    Cout, K, stride = 8, 3, 1

    key = jax.random.PRNGKey(0)
    kx, kw = jax.random.split(key)
    x = jax.random.normal(kx, (N, Cin, H, W), dtype=jnp.float32)
    fan_in = Cin * K * K
    weight = jax.random.normal(kw, (Cout, Cin, K, K), dtype=jnp.float32) / jnp.sqrt(
        jnp.float32(fan_in))

    out = basic_conv(x, weight, stride=stride, relu=True)
    out = jax.block_until_ready(out)

    # Reference 1: same numerics as the kernel (bf16 operands, f32 accumulate).
    ref_bf16 = jax.lax.conv_general_dilated(
        x.astype(jnp.bfloat16), weight.astype(jnp.bfloat16),
        window_strides=(stride, stride),
        padding=[(K // 2, K // 2), (K // 2, K // 2)],
        dimension_numbers=("NCHW", "OIHW", "NCHW"),
        preferred_element_type=jnp.float32)
    ref_bf16 = jnp.maximum(ref_bf16, 0.0).astype(x.dtype)

    # Reference 2: plain f32 conv + ReLU (loose tolerance covers the bf16 cast).
    ref_f32 = jax.lax.conv_general_dilated(
        x, weight, window_strides=(stride, stride),
        padding=[(K // 2, K // 2), (K // 2, K // 2)],
        dimension_numbers=("NCHW", "OIHW", "NCHW"))
    ref_f32 = jnp.maximum(ref_f32, 0.0)

    assert out.shape == ref_f32.shape == (N, Cout, H, W)
    assert jnp.allclose(out, ref_bf16, atol=2e-3, rtol=2e-3), \
        float(jnp.max(jnp.abs(out - ref_bf16)))
    assert jnp.allclose(out, ref_f32, atol=6e-2, rtol=6e-2), \
        float(jnp.max(jnp.abs(out - ref_f32)))
    print("KERNEL_OK")
</pallas_src>

<mosaic_0001>
module attributes {stable_mosaic.version = 11 : i64} {
  func.func @kernel(%arg0: i32, %arg1: memref<2x18x72xbf16, #tpu.memory_space<vmem>>, %arg2: memref<3x72x128xbf16, #tpu.memory_space<vmem>>, %arg3: memref<32x128xf32, #tpu.memory_space<vmem>>) attributes {dimension_semantics = [#tpu.dimension_semantics<arbitrary>], iteration_bounds = array<i64: 1>, scalar_prefetch = 0 : i64, scratch_operands = 0 : i64, tpu.core_type = #tpu.core_type<tc>, window_params = [{pipeline_mode = #tpu.pipeline_mode<synchronous>, transform_indices = @transform_0, window_bounds = array<i64: 2, 18, 72>}, {pipeline_mode = #tpu.pipeline_mode<synchronous>, transform_indices = @transform_1, window_bounds = array<i64: 3, 72, 128>}, {pipeline_mode = #tpu.pipeline_mode<synchronous>, transform_indices = @transform_2, window_bounds = array<i64: 32, 128>}]} {
    %cst = arith.constant 0.000000e+00 : f32
    %0 = vector.broadcast %cst : f32 to vector<32x128xf32>
    %c0 = arith.constant 0 : index
    %c0_0 = arith.constant 0 : index
    %c0_1 = arith.constant 0 : index
    %1 = vector.load %arg1[%c0, %c0_0, %c0_1] : memref<2x18x72xbf16, #tpu.memory_space<vmem>>, vector<2x16x72xbf16>
    %2 = vector.shape_cast %1 : vector<2x16x72xbf16> to vector<32x72xbf16>
    %c0_2 = arith.constant 0 : index
    %c0_3 = arith.constant 0 : index
    %c0_4 = arith.constant 0 : index
    %3 = vector.load %arg2[%c0_2, %c0_3, %c0_4] : memref<3x72x128xbf16, #tpu.memory_space<vmem>>, vector<1x72x128xbf16>
    %4 = vector.shape_cast %3 : vector<1x72x128xbf16> to vector<72x128xbf16>
    %cst_5 = arith.constant dense<0.000000e+00> : vector<32x128xf32>
    %5 = tpu.matmul %2, %4, %cst_5 {dimension_numbers = #tpu.dot_dimension_numbers<[1], [0], [0], [1], [0, 0, 1, 1], [], []>} : vector<32x72xbf16>, vector<72x128xbf16>, vector<32x128xf32> -> vector<32x128xf32>
    %6 = arith.addf %0, %5 : vector<32x128xf32>
    %c0_6 = arith.constant 0 : index
    %c1 = arith.constant 1 : index
    %c0_7 = arith.constant 0 : index
    %7 = vector.load %arg1[%c0_6, %c1, %c0_7] : memref<2x18x72xbf16, #tpu.memory_space<vmem>>, vector<2x16x72xbf16>
    %8 = vector.shape_cast %7 : vector<2x16x72xbf16> to vector<32x72xbf16>
    %c1_8 = arith.constant 1 : index
    %c0_9 = arith.constant 0 : index
    %c0_10 = arith.constant 0 : index
    %9 = vector.load %arg2[%c1_8, %c0_9, %c0_10] : memref<3x72x128xbf16, #tpu.memory_space<vmem>>, vector<1x72x128xbf16>
    %10 = vector.shape_cast %9 : vector<1x72x128xbf16> to vector<72x128xbf16>
    %cst_11 = arith.constant dense<0.000000e+00> : vector<32x128xf32>
    %11 = tpu.matmul %8, %10, %cst_11 {dimension_numbers = #tpu.dot_dimension_numbers<[1], [0], [0], [1], [0, 0, 1, 1], [], []>} : vector<32x72xbf16>, vector<72x128xbf16>, vector<32x128xf32> -> vector<32x128xf32>
    %12 = arith.addf %6, %11 : vector<32x128xf32>
    %c0_12 = arith.constant 0 : index
    %c2 = arith.constant 2 : index
    %c0_13 = arith.constant 0 : index
    %13 = vector.load %arg1[%c0_12, %c2, %c0_13] : memref<2x18x72xbf16, #tpu.memory_space<vmem>>, vector<2x16x72xbf16>
    %14 = vector.shape_cast %13 : vector<2x16x72xbf16> to vector<32x72xbf16>
    %c2_14 = arith.constant 2 : index
    %c0_15 = arith.constant 0 : index
    %c0_16 = arith.constant 0 : index
    %15 = vector.load %arg2[%c2_14, %c0_15, %c0_16] : memref<3x72x128xbf16, #tpu.memory_space<vmem>>, vector<1x72x128xbf16>
    %16 = vector.shape_cast %15 : vector<1x72x128xbf16> to vector<72x128xbf16>
    %cst_17 = arith.constant dense<0.000000e+00> : vector<32x128xf32>
    %17 = tpu.matmul %14, %16, %cst_17 {dimension_numbers = #tpu.dot_dimension_numbers<[1], [0], [0], [1], [0, 0, 1, 1], [], []>} : vector<32x72xbf16>, vector<72x128xbf16>, vector<32x128xf32> -> vector<32x128xf32>
    %18 = arith.addf %12, %17 : vector<32x128xf32>
    %cst_18 = arith.constant 0.000000e+00 : f32
    %19 = vector.broadcast %cst_18 : f32 to vector<32x128xf32>
    %20 = arith.maximumf %18, %19 : vector<32x128xf32>
    %c0_19 = arith.constant 0 : index
    %c0_20 = arith.constant 0 : index
    %21 = vector.load %arg3[%c0_19, %c0_20] : memref<32x128xf32, #tpu.memory_space<vmem>>, vector<32x128xf32>
    tpu.vector_store %arg3[%c0_19, %c0_20], %20 {strides = array<i32>} : memref<32x128xf32, #tpu.memory_space<vmem>>, vector<32x128xf32>,
    return
  }
  func.func @transform_0(%arg0: i32) -> (i32, i32, i32) {
    %c0_i32 = arith.constant 0 : i32
    %c0_i32_0 = arith.constant 0 : i32
    %c0_i32_1 = arith.constant 0 : i32
    %c0_i32_2 = arith.constant 0 : i32
    return %c0_i32, %c0_i32_0, %c0_i32_1 : i32, i32, i32
  }
  func.func @transform_1(%arg0: i32) -> (i32, i32, i32) {
    %c0_i32 = arith.constant 0 : i32
    %c0_i32_0 = arith.constant 0 : i32
    %c0_i32_1 = arith.constant 0 : i32
    %c0_i32_2 = arith.constant 0 : i32
    return %c0_i32, %c0_i32_0, %c0_i32_1 : i32, i32, i32
  }
  func.func @transform_2(%arg0: i32) -> (i32, i32) {
    %c0_i32 = arith.constant 0 : i32
    %c0_i32_0 = arith.constant 0 : i32
    %c0_i32_1 = arith.constant 0 : i32
    return %c0_i32, %c0_i32_0 : i32, i32
  }
}

</mosaic_0001>

<llo_original>
// kernel: tpu_custom_call.1
$region0: #{tpu_custom_call.1}
  #allocation0 [shape = 'u32[]', space=smem, size = 0x4, offset = 0x4, fixed_abs, tag = 'smem constant byte address 0x4 - core index']
  #allocation1 [shape = 'u32[144,128]{1,0:T(1,128)}', space=vmem, size = 0x12000, scoped, tag = 'internal scratch']
  %s0 = inlined_call_operand.vmem [shape: bf16[2,18,72], index: 0, kind: input, shape index: {}]
  %s1 = inlined_call_operand.hbm [shape: bf16[3,72,128], index: 1, kind: input, shape index: {}]
  %s2 = inlined_call_operand.hbm [shape: f32[32,128], index: 2, kind: output, shape index: {}]
  %s3 = sld [smem:[#allocation0]]
  $region22: #{tpu_custom_call.1} parent=0
    _
  %s5 = ssub.s32 1, %s3
  %s6 = scalar_select 0, %s5, %s3
  $region1: #{tpu_custom_call.1} parent=0
    #allocation2 [shape = 'u8[55296]{0}', space=vmem, size = 0xd800, scoped, tag = 'input window, operand 1, single buffered']
    #allocation3 [shape = 's32[1]{0}', space=sflag, size = 0x4, scoped, tag = 'scoped memory for tpu_custom_call.1']
    #allocation4 [shape = 's32[1]{0}', space=sflag, size = 0x4, scoped, tag = 'scoped memory for tpu_custom_call.1']
    #allocation5 [shape = 'u8[16384]{0}', space=vmem, size = 0x4000, scoped, tag = 'output window, operand 0, single buffered']
    %7 = vsyncpa [#allocation3], 0
    %8 = vsyncpa [#allocation4], 0
    // Predicated region
    $region2: #{tpu_custom_call.1} parent=1 // pred_check
      _
    $region3: #{tpu_custom_call.1} parent=1 // pred_check_branch
      %10 = sbr.rel (0) target = $region5
    $region4: #{tpu_custom_call.1} parent=1 // pred_region
      _
    $region5: #{tpu_custom_call.1} parent=1 // pred_fallthru
      _
    // Predicated region
    $region6: #{tpu_custom_call.1} parent=1 // pred_check
      _
    $region7: #{tpu_custom_call.1} parent=1 // pred_check_branch
      %12 = sbr.rel (0) target = $region9
    $region8: #{tpu_custom_call.1} parent=1 // pred_region
      %s14 = ssub.s32 1728, 1728
      %15 = vsyncadd [#allocation3], %s14
      %s16 = sshll.u32 [#allocation2], 4
      %s17 = int_to_ptr.vmem [resolvable:$true] %s16
      %22 = dma.hbm_to_vmem [thread:$0]  %s1, 1728, %s17, [#allocation3], 64, 64, 4
    $region9: #{tpu_custom_call.1} parent=1 // pred_fallthru
      _
    // Predicated region
    $region10: #{tpu_custom_call.1} parent=1 // pred_check
      _
    $region11: #{tpu_custom_call.1} parent=1 // pred_check_branch
      %24 = sbr.rel (0) target = $region13
    $region12: #{tpu_custom_call.1} parent=1 // pred_region
      %25 = dma.done [#allocation3], 1728
    $region13: #{tpu_custom_call.1} parent=1 // pred_fallthru
      _
    %v27 = vld [vmem:[%s0] sm:$0xf]
    %v28 = vld [vmem:[%s0 + $0x4] sm:$0xf]
    %v29 = vld [vmem:[%s0 + $0xc] sm:$0xf]
    %v30 = vld [vmem:[%s0 + $0x10] sm:$0xf]
    %v31 = vld [vmem:[#allocation2] sm:$0xf]
    %v32 = vld [vmem:[#allocation2 + $0x4] sm:$0xf]
    %v33 = vld [vmem:[#allocation2 + $0x8] sm:$0xf]
    %v34 = vld [vmem:[#allocation2 + $0xc] sm:$0xf]
    %v35 = vld [vmem:[#allocation2 + $0x10] sm:$0xf]
    %v36 = vld [vmem:[#allocation2 + $0x14] sm:$0xf]
    %v37 = vld [vmem:[#allocation2 + $0x18] sm:$0xf]
    %v38 = vld [vmem:[#allocation2 + $0x1c] sm:$0xf]
    %v39 = vld [vmem:[#allocation2 + $0x20] sm:$0xf]
    %v40 = vld [vmem:[%s0 + $0x8] sm:$0x1]
    %v41 = vld [vmem:[%s0 + $0x14] sm:$0x1]
    %vm42 = vsmask.f32 3328
    %vm43 = vsmask.f32 7440
    %vm44 = vmor %vm42, %vm43
    %v46 = vshrl.u32 %v27, 16
    %v48 = vrot.slane %v46, 4
    %v49 = vshll.u32 %v27, 16
    %v51 = vrot.slane %v49, 5
    %v52 = vor.u32 %v48, %v51
    %v53 = vrot.slane %v52, 4
    %v55 = vshll.u32 %v28, 16
    %v57 = vrot.slane %v55, 5
    %v58 = vsel %vm44, %v53, %v57
    %v59 = vshrl.u32 %v28, 16
    %v61 = vrot.slane %v59, 4
    %v62 = vor.u32 %v61, %v57
    %v63 = vrot.slane %v62, 4
    %v65 = vshll.u32 %v40, 16
    %v67 = vrot.slane %v65, 5
    %v68 = vsel %vm44, %v63, %v67
    %v70 = vshrl.u32 %v29, 16
    %v72 = vrot.slane %v70, 4
    %v73 = vshll.u32 %v29, 16
    %v75 = vrot.slane %v73, 5
    %v76 = vor.u32 %v72, %v75
    %v77 = vrot.slane %v76, 4
    %v79 = vshll.u32 %v30, 16
    %v81 = vrot.slane %v79, 5
    %v82 = vsel %vm44, %v77, %v81
    %v83 = vshrl.u32 %v30, 16
    %v85 = vrot.slane %v83, 4
    %v86 = vor.u32 %v85, %v81
    %v87 = vrot.slane %v86, 4
    %v89 = vshll.u32 %v41, 16
    %v91 = vrot.slane %v89, 5
    %v92 = vsel %vm44, %v87, %v91
    %s93 = scalar_lea.vmem [#allocation2], 36
    %v94 = vld [vmem:[%s93] sm:$0xf]
    %v95 = vld [vmem:[%s93 + $0x4] sm:$0xf]
    %v96 = vld [vmem:[%s93 + $0x8] sm:$0xf]
    %v97 = vld [vmem:[%s93 + $0xc] sm:$0xf]
    %v98 = vld [vmem:[%s93 + $0x10] sm:$0xf]
    %v99 = vld [vmem:[%s93 + $0x14] sm:$0xf]
    %v100 = vld [vmem:[%s93 + $0x18] sm:$0xf]
    %v101 = vld [vmem:[%s93 + $0x1c] sm:$0xf]
    %v102 = vld [vmem:[%s93 + $0x20] sm:$0xf]
    %v103 = vunpack.c.l.b16 %v58
    %v104 = vunpack.c.l.b16 %v68
    %v105 = vunpack.c.l.b16 %v82
    %v106 = vunpack.c.l.b16 %v92
    %v107 = vpack.c.b16 %v104, %v103
    %v108 = vpack.c.b16 %v106, %v105
    %v118 = vunpack.c.l.b16 %v94
    %v119 = vunpack.c.l.b16 %v95
    %v120 = vunpack.c.l.b16 %v96
    %v121 = vunpack.c.l.b16 %v97
    %v122 = vunpack.c.l.b16 %v98
    %v123 = vunpack.c.l.b16 %v99
    %v124 = vunpack.c.l.b16 %v100
    %v125 = vunpack.c.l.b16 %v101
    %v126 = vunpack.c.l.b16 %v102
    %v127 = vpack.c.b16 %v119, %v118
    %v128 = vpack.c.b16 %v121, %v120
    %v129 = vpack.c.b16 %v123, %v122
    %v130 = vpack.c.b16 %v125, %v124
    %v131 = vpack.c.b16 %v126, %v126
    %vm136 = vcmask 588800
    %v138 = vsel %vm136, %v107, 0
    %v141 = vsel %vm136, %v108, 0
    %vm143 = vcmask 1043456
    %v145 = vsel %vm143, %v131, 0
    %147 = vmatprep.subr.bf16.mxu0 0
    %148 = vmatpush1.bf16.msra.mxu0 0
    %149 = vmatprep.subr.bf16.mxu0 0
    %150 = vmatpush1.bf16.msra.mxu0 0
    %151 = vmatprep.subr.bf16.mxu0 0
    %152 = vmatpush1.bf16.msra.mxu0 0
    %153 = vmatprep.subr.bf16.mxu0 0
    %154 = vmatpush1.bf16.msra.mxu0 %v145
    %155 = vmatprep.subr.bf16.mxu0 0
    %156 = vmatpush1.bf16.msra.mxu0 %v130
    %157 = vmatprep.subr.bf16.mxu0 0
    %158 = vmatpush1.bf16.msra.mxu0 %v129
    %159 = vmatprep.subr.bf16.mxu0 0
    %160 = vmatpush1.bf16.msra.mxu0 %v128
    %161 = vmatprep.subr.bf16.mxu0 0
    %162 = vmatpush1.bf16.msra.mxu0 %v127
    %163 = vmatprep.subr.bf16.mxu0 0
    %164 = vmatpush2.bf16.msra.mxu0 0
    %165 = vmatprep.subr.bf16.mxu0 0
    %166 = vmatpush2.bf16.msra.mxu0 0
    %167 = vmatprep.subr.bf16.mxu0 0
    %168 = vmatpush2.bf16.msra.mxu0 0
    %169 = vmatprep.subr.bf16.mxu0 0
    %170 = vmatpush2.bf16.msra.mxu0 0
    %171 = vmatprep.subr.bf16.mxu0 0
    %172 = vmatpush2.bf16.msra.mxu0 0
    %173 = vmatprep.subr.bf16.mxu0 0
    %174 = vmatpush2.bf16.msra.mxu0 0
    %175 = vmatprep.subr.bf16.mxu0 0
    %176 = vmatpush2.bf16.msra.mxu0 0
    %177 = vmatprep.subr.bf16.mxu0 0
    %178 = vmatpush2.bf16.msra.mxu0 0
    %179 = vmatprep.mubr.bf16.mxu0 0
    %180 = vmatmul.mubr.bf16.gmra.mxu0 %v138
    %v181 = vpop.f32.mrf.mxu0
    %v182 = vadd.f32 0.0, %v181
    %v183 = vpop.f32.mrf.mxu0
    %v184 = vpop.f32.mrf.mxu0
    %v185 = vadd.f32 0.0, %v184
    %v186 = vpop.f32.mrf.mxu0
    %187 = vmatprep.mubr.bf16.mxu0 0
    %188 = vmatmul.mubr.bf16.gmra.mxu0 %v141
    %v189 = vpop.f32.mrf.mxu0
    %v190 = vadd.f32 0.0, %v189
    %v191 = vpop.f32.mrf.mxu0
    %v192 = vpop.f32.mrf.mxu0
    %v193 = vadd.f32 0.0, %v192
    %v194 = vpop.f32.mrf.mxu0
    %195 = vdwg.mxu0
    %v200 = vunpack.c.l.b16 %v27
    %v201 = vunpack.c.l.b16 %v28
    %v202 = vunpack.c.l.b16 %v29
    %v203 = vunpack.c.l.b16 %v30
    %v204 = vpack.c.b16 %v201, %v200
    %v205 = vpack.c.b16 %v203, %v202
    %v215 = vunpack.c.l.b16 %v31
    %v216 = vunpack.c.l.b16 %v32
    %v217 = vunpack.c.l.b16 %v33
    %v218 = vunpack.c.l.b16 %v34
    %v219 = vunpack.c.l.b16 %v35
    %v220 = vunpack.c.l.b16 %v36
    %v221 = vunpack.c.l.b16 %v37
    %v222 = vunpack.c.l.b16 %v38
    %v223 = vunpack.c.l.b16 %v39
    %v224 = vpack.c.b16 %v216, %v215
    %v225 = vpack.c.b16 %v218, %v217
    %v226 = vpack.c.b16 %v220, %v219
    %v227 = vpack.c.b16 %v222, %v221
    %v228 = vpack.c.b16 %v223, %v223
    %v234 = vsel %vm136, %v204, 0
    %v237 = vsel %vm136, %v205, 0
    %v240 = vsel %vm143, %v228, 0
    %242 = vmatprep.subr.bf16.mxu0 0
    %243 = vmatpush1.bf16.msra.mxu0 0
    %244 = vmatprep.subr.bf16.mxu0 0
    %245 = vmatpush1.bf16.msra.mxu0 0
    %246 = vmatprep.subr.bf16.mxu0 0
    %247 = vmatpush1.bf16.msra.mxu0 0
    %248 = vmatprep.subr.bf16.mxu0 0
    %249 = vmatpush1.bf16.msra.mxu0 %v240
    %250 = vmatprep.subr.bf16.mxu0 0
    %251 = vmatpush1.bf16.msra.mxu0 %v227
    %252 = vmatprep.subr.bf16.mxu0 0
    %253 = vmatpush1.bf16.msra.mxu0 %v226
    %254 = vmatprep.subr.bf16.mxu0 0
    %255 = vmatpush1.bf16.msra.mxu0 %v225
    %256 = vmatprep.subr.bf16.mxu0 0
    %257 = vmatpush1.bf16.msra.mxu0 %v224
    %258 = vmatprep.subr.bf16.mxu0 0
    %259 = vmatpush2.bf16.msra.mxu0 0
    %260 = vmatprep.subr.bf16.mxu0 0
    %261 = vmatpush2.bf16.msra.mxu0 0
    %262 = vmatprep.subr.bf16.mxu0 0
    %263 = vmatpush2.bf16.msra.mxu0 0
    %264 = vmatprep.subr.bf16.mxu0 0
    %265 = vmatpush2.bf16.msra.mxu0 0
    %266 = vmatprep.subr.bf16.mxu0 0
    %267 = vmatpush2.bf16.msra.mxu0 0
    %268 = vmatprep.subr.bf16.mxu0 0
    %269 = vmatpush2.bf16.msra.mxu0 0
    %270 = vmatprep.subr.bf16.mxu0 0
    %271 = vmatpush2.bf16.msra.mxu0 0
    %272 = vmatprep.subr.bf16.mxu0 0
    %273 = vmatpush2.bf16.msra.mxu0 0
    %274 = vmatprep.mubr.bf16.mxu0 0
    %275 = vmatmul.mubr.bf16.gmra.mxu0 %v234
    %v276 = vpop.f32.mrf.mxu0
    %v277 = vadd.f32 %v182, %v276
    %v278 = vpop.f32.mrf.mxu0
    %v279 = vpop.f32.mrf.mxu0
    %v280 = vadd.f32 %v185, %v279
    %v281 = vpop.f32.mrf.mxu0
    %282 = vmatprep.mubr.bf16.mxu0 0
    %283 = vmatmul.mubr.bf16.gmra.mxu0 %v237
    %v284 = vpop.f32.mrf.mxu0
    %v285 = vadd.f32 %v190, %v284
    %v286 = vpop.f32.mrf.mxu0
    %v287 = vpop.f32.mrf.mxu0
    %v288 = vadd.f32 %v193, %v287
    %v289 = vpop.f32.mrf.mxu0
    %290 = vdwg.mxu0
    %v291 = vld [vmem:[%s0] sm:$0xe]
    %v292 = vld [vmem:[%s0 + $0xc] sm:$0xe]
    %vm297 = vcmask 1042432
    %vm298 = vcmask 1046532
    %vm299 = vmor %vm297, %vm298
    %v300 = vrot.slane %v291, 5
    %v301 = vrot.slane %v300, 4
    %v302 = vrot.slane %v28, 5
    %v303 = vsel %vm299, %v301, %v302
    %v304 = vrot.slane %v302, 4
    %v305 = vrot.slane %v40, 5
    %v306 = vsel %vm299, %v304, %v305
    %v307 = vrot.slane %v292, 5
    %v308 = vrot.slane %v307, 4
    %v309 = vrot.slane %v30, 5
    %v310 = vsel %vm299, %v308, %v309
    %v311 = vrot.slane %v309, 4
    %v312 = vrot.slane %v41, 5
    %v313 = vsel %vm299, %v311, %v312
    %s314 = scalar_lea.vmem [#allocation2], 72
    %v315 = vld [vmem:[%s314] sm:$0xf]
    %v316 = vld [vmem:[%s314 + $0x4] sm:$0xf]
    %v317 = vld [vmem:[%s314 + $0x8] sm:$0xf]
    %v318 = vld [vmem:[%s314 + $0xc] sm:$0xf]
    %v319 = vld [vmem:[%s314 + $0x10] sm:$0xf]
    %v320 = vld [vmem:[%s314 + $0x14] sm:$0xf]
    %v321 = vld [vmem:[%s314 + $0x18] sm:$0xf]
    %v322 = vld [vmem:[%s314 + $0x1c] sm:$0xf]
    %v323 = vld [vmem:[%s314 + $0x20] sm:$0xf]
    %v324 = vunpack.c.l.b16 %v303
    %v325 = vunpack.c.l.b16 %v306
    %v326 = vunpack.c.l.b16 %v310
    %v327 = vunpack.c.l.b16 %v313
    %v328 = vpack.c.b16 %v325, %v324
    %v329 = vpack.c.b16 %v327, %v326
    %v339 = vunpack.c.l.b16 %v315
    %v340 = vunpack.c.l.b16 %v316
    %v341 = vunpack.c.l.b16 %v317
    %v342 = vunpack.c.l.b16 %v318
    %v343 = vunpack.c.l.b16 %v319
    %v344 = vunpack.c.l.b16 %v320
    %v345 = vunpack.c.l.b16 %v321
    %v346 = vunpack.c.l.b16 %v322
    %v347 = vunpack.c.l.b16 %v323
    %v348 = vpack.c.b16 %v340, %v339
    %v349 = vpack.c.b16 %v342, %v341
    %v350 = vpack.c.b16 %v344, %v343
    %v351 = vpack.c.b16 %v346, %v345
    %v352 = vpack.c.b16 %v347, %v347
    %v358 = vsel %vm136, %v328, 0
    %v361 = vsel %vm136, %v329, 0
    %v364 = vsel %vm143, %v352, 0
    %366 = vmatprep.subr.bf16.mxu0 0
    %367 = vmatpush1.bf16.msra.mxu0 0
    %368 = vmatprep.subr.bf16.mxu0 0
    %369 = vmatpush1.bf16.msra.mxu0 0
    %370 = vmatprep.subr.bf16.mxu0 0
    %371 = vmatpush1.bf16.msra.mxu0 0
    %372 = vmatprep.subr.bf16.mxu0 0
    %373 = vmatpush1.bf16.msra.mxu0 %v364
    %374 = vmatprep.subr.bf16.mxu0 0
    %375 = vmatpush1.bf16.msra.mxu0 %v351
    %376 = vmatprep.subr.bf16.mxu0 0
    %377 = vmatpush1.bf16.msra.mxu0 %v350
    %378 = vmatprep.subr.bf16.mxu0 0
    %379 = vmatpush1.bf16.msra.mxu0 %v349
    %380 = vmatprep.subr.bf16.mxu0 0
    %381 = vmatpush1.bf16.msra.mxu0 %v348
    %382 = vmatprep.subr.bf16.mxu0 0
    %383 = vmatpush2.bf16.msra.mxu0 0
    %384 = vmatprep.subr.bf16.mxu0 0
    %385 = vmatpush2.bf16.msra.mxu0 0
    %386 = vmatprep.subr.bf16.mxu0 0
    %387 = vmatpush2.bf16.msra.mxu0 0
    %388 = vmatprep.subr.bf16.mxu0 0
    %389 = vmatpush2.bf16.msra.mxu0 0
    %390 = vmatprep.subr.bf16.mxu0 0
    %391 = vmatpush2.bf16.msra.mxu0 0
    %392 = vmatprep.subr.bf16.mxu0 0
    %393 = vmatpush2.bf16.msra.mxu0 0
    %394 = vmatprep.subr.bf16.mxu0 0
    %395 = vmatpush2.bf16.msra.mxu0 0
    %396 = vmatprep.subr.bf16.mxu0 0
    %397 = vmatpush2.bf16.msra.mxu0 0
    %398 = vmatprep.mubr.bf16.mxu0 0
    %399 = vmatmul.mubr.bf16.gmra.mxu0 %v358
    %v400 = vpop.f32.mrf.mxu0
    %v401 = vadd.f32 0.0, %v400
    %v402 = vpop.f32.mrf.mxu0
    %v403 = vpop.f32.mrf.mxu0
    %v404 = vadd.f32 0.0, %v403
    %v405 = vpop.f32.mrf.mxu0
    %406 = vmatprep.mubr.bf16.mxu0 0
    %407 = vmatmul.mubr.bf16.gmra.mxu0 %v361
    %v408 = vpop.f32.mrf.mxu0
    %v409 = vadd.f32 0.0, %v408
    %v410 = vpop.f32.mrf.mxu0
    %v411 = vpop.f32.mrf.mxu0
    %v412 = vadd.f32 0.0, %v411
    %v413 = vpop.f32.mrf.mxu0
    %414 = vdwg.mxu0
    %v415 = vadd.f32 %v277, %v401
    %v416 = vadd.f32 %v280, %v404
    %v417 = vadd.f32 %v285, %v409
    %v418 = vadd.f32 %v288, %v412
    %v419 = vmax.f32 %v415, 0.0
    %v420 = vmax.f32 %v416, 0.0
    %v421 = vmax.f32 %v417, 0.0
    %v422 = vmax.f32 %v418, 0.0
    %423 = vst [vmem:[#allocation5] sm:$0xff] %v419
    %424 = vst [vmem:[#allocation5 + $0x8] sm:$0xff] %v420
    %425 = vst [vmem:[#allocation5 + $0x10] sm:$0xff] %v421
    %426 = vst [vmem:[#allocation5 + $0x18] sm:$0xff] %v422
    // Predicated region
    $region14: #{tpu_custom_call.1} parent=1 // pred_check
      _
    $region15: #{tpu_custom_call.1} parent=1 // pred_check_branch
      %428 = sbr.rel (0) target = $region17
    $region16: #{tpu_custom_call.1} parent=1 // pred_region
      %s430 = ssub.s32 512, 512
      %431 = vsyncadd [#allocation4], %s430
      %s432 = sshll.u32 [#allocation5], 4
      %s433 = int_to_ptr.vmem [resolvable:$true] %s432
      %438 = dma.vmem_to_hbm [thread:$0]  %s433, 512, %s2, [#allocation4], 128, 128, 8
    $region17: #{tpu_custom_call.1} parent=1 // pred_fallthru
      _
    // Predicated region
    $region18: #{tpu_custom_call.1} parent=1 // pred_check
      _
    $region19: #{tpu_custom_call.1} parent=1 // pred_check_branch
      %440 = sbr.rel (0) target = $region21
    $region20: #{tpu_custom_call.1} parent=1 // pred_region
      %441 = dma.done [#allocation4], 512
    $region21: #{tpu_custom_call.1} parent=1 // pred_fallthru
      _
    %442 = vsyncpa [#allocation3], 1
    %443 = vsyncpa [#allocation4], 1

</llo_original>
